<compile_context>
chip_gen: v7x
topology: tpu7x:2x2x1
jax: 0.10.0
libtpu: 0.0.40
codegen_flags: <defaults>
</compile_context>

<pallas_src>
import math

import jax
import jax.numpy as jnp
from jax.experimental import pallas as pl
from jax.experimental.pallas import tpu as pltpu

_LANE = 128
_SUBLANE = 8


def _round_up(x: int, m: int) -> int:
    return ((x + m - 1) // m) * m


def _rule_belief_kernel(w_ref, beta_ref, out_ref):
    # w_ref:    [TB, K]   rule activation weights (batch tile)
    # beta_ref: [K,  Hp]  rule belief degrees, lane-padded with zeros
    # out_ref:  [TB, Hp]  normalized output beliefs (padded cols are exactly 0)
    w = w_ref[...]                       # [TB, K]   single VMEM load
    beta = beta_ref[...]                 # [K, Hp]
    omw = 1.0 - w                        # [TB, K]   hoisted out of the K loop

    TB, K = w.shape
    Hp = beta.shape[1]

    # K is small and static -> unrolled product over the rule axis, seeded
    # with k == 0 to save one multiply per element.
    w0 = w[:, 0:1]                       # [TB, 1]
    omw0 = omw[:, 0:1]                   # [TB, 1]
    prod1 = w0 * beta[0:1, :] + omw0     # [TB, Hp]
    prod2 = omw0                         # [TB, 1]
    for k in range(1, K):
        wk = w[:, k:k + 1]
        omwk = omw[:, k:k + 1]
        prod1 = prod1 * (wk * beta[k:k + 1, :] + omwk)
        prod2 = prod2 * omwk

    p = prod1 - prod2                              # [TB, Hp]
    denom = jnp.sum(p, axis=-1, keepdims=True)     # [TB, 1]
    # EUP approx reciprocal + one Newton-Raphson step -> ~f32 accuracy.
    # (Semantics match the PyTorch module: no epsilon guard on denom.)
    r = pl.reciprocal(denom, approx=True)
    r = r * (2.0 - denom * r)
    out_ref[...] = p * r


def rule_belief_forward(w_rule_act: jax.Array, beta: jax.Array,
                        *, tile_b: int = 1024) -> jax.Array:
    """Pallas wrapper: lane-pad H to 128, tile the batch axis, pipeline DMAs."""
    B, K = w_rule_act.shape
    K2, H = beta.shape
    assert K == K2

    w = w_rule_act if w_rule_act.dtype == jnp.float32 else w_rule_act.astype(jnp.float32)
    bt = beta if beta.dtype == jnp.float32 else beta.astype(jnp.float32)

    # Lane-pad hypotheses with exact zeros (keeps the math exact, see header).
    Hp = _round_up(H, _LANE)
    if Hp != H:
        bt = jnp.pad(bt, ((0, 0), (0, Hp - H)))

    # Batch tile: multiple of 8 sublanes, capped (2 bufs * TB * (K + Hp) * 4B
    # stays far under the 32 MiB default scoped VMEM even on v7x).
    TB = min(tile_b, _round_up(B, _SUBLANE))
    Bp = _round_up(B, TB)
    if Bp != B:
        # Padded rows get a benign activation value; they are sliced off below.
        w = jnp.pad(w, ((0, Bp - B), (0, 0)), constant_values=0.5)

    out = pl.pallas_call(
        _rule_belief_kernel,
        out_shape=jax.ShapeDtypeStruct((Bp, Hp), jnp.float32),
        grid_spec=pltpu.PrefetchScalarGridSpec(
            num_scalar_prefetch=0,
            grid=(Bp // TB,),
            in_specs=[
                pl.BlockSpec((TB, K), lambda i: (i, 0)),   # batch-tiled W
                pl.BlockSpec((K, Hp), lambda i: (0, 0)),   # beta resident
            ],
            out_specs=pl.BlockSpec((TB, Hp), lambda i: (i, 0)),
        ),
        compiler_params=pltpu.CompilerParams(
            dimension_semantics=("parallel",)),            # v7x: shard over 2 TCs
    )(w, bt)

    return out[:B, :H]


def init_beta(key: jax.Array, num_k: int, num_h: int) -> jax.Array:
    """Deterministic re-implementation of the module's reset_parameters():
    kaiming_uniform_(a=sqrt(5)) on a [num_k, num_h] tensor, then row-softmax."""
    a = math.sqrt(5.0)
    fan_in = num_h                       # PyTorch fan_in for a [k, h] 2-D weight
    gain = math.sqrt(2.0 / (1.0 + a * a))
    bound = gain * math.sqrt(3.0 / fan_in)
    raw = jax.random.uniform(key, (num_k, num_h), minval=-bound, maxval=bound,
                             dtype=jnp.float32)
    return jax.nn.softmax(raw, axis=1)


def rule_belief_ref(w_rule_act: jax.Array, beta: jax.Array) -> jax.Array:
    """Pure-JAX reference of the PyTorch forward, for verification."""
    w = w_rule_act[:, :, None]           # [B, K, 1]
    b = beta[None, :, :]                 # [1, K, H]
    prod1 = jnp.prod(w * b + 1.0 - w, axis=1)                   # [B, H]
    prod2 = jnp.prod(1.0 - w_rule_act, axis=1, keepdims=True)   # [B, 1]
    p = prod1 - prod2
    return p / jnp.sum(p, axis=-1, keepdims=True)


if __name__ == "__main__":
    num_k = 4      # number of rules
    num_h = 32     # number of hypotheses
    batch = 8

    key = jax.random.PRNGKey(0)
    k_beta, k_w = jax.random.split(key)

    beta = init_beta(k_beta, num_k, num_h)                      # [K, H]
    # rule activation weights in (0, 1), like normalized matching degrees
    w_rule_act = jax.random.uniform(k_w, (batch, num_k), dtype=jnp.float32)

    out = rule_belief_forward(w_rule_act, beta)
    out = jax.block_until_ready(out)

    ref = rule_belief_ref(w_rule_act, beta)
    assert out.shape == (batch, num_h)
    assert bool(jnp.allclose(out, ref, atol=1e-5, rtol=1e-5)), "mismatch vs reference"

    print("KERNEL_OK")
</pallas_src>

<mosaic_0001>
module attributes {stable_mosaic.version = 11 : i64} {
  func.func @_rule_belief_kernel(%arg0: i32, %arg1: memref<8x4xf32, #tpu.memory_space<vmem>>, %arg2: memref<4x128xf32, #tpu.memory_space<vmem>>, %arg3: memref<8x128xf32, #tpu.memory_space<vmem>>) attributes {dimension_semantics = [#tpu.dimension_semantics<parallel>], iteration_bounds = array<i64: 1>, scalar_prefetch = 0 : i64, scratch_operands = 0 : i64, tpu.core_type = #tpu.core_type<tc>, window_params = [{transform_indices = @transform_0, window_bounds = array<i64: 8, 4>}, {pipeline_mode = #tpu.pipeline_mode<synchronous>, transform_indices = @transform_1, window_bounds = array<i64: 4, 128>}, {transform_indices = @transform_2, window_bounds = array<i64: 8, 128>}]} {
    %c0 = arith.constant 0 : index
    %c0_0 = arith.constant 0 : index
    %0 = vector.load %arg1[%c0, %c0_0] : memref<8x4xf32, #tpu.memory_space<vmem>>, vector<8x4xf32>
    %c0_1 = arith.constant 0 : index
    %c0_2 = arith.constant 0 : index
    %1 = vector.load %arg2[%c0_1, %c0_2] : memref<4x128xf32, #tpu.memory_space<vmem>>, vector<4x128xf32>
    %cst = arith.constant 1.000000e+00 : f32
    %2 = vector.broadcast %cst : f32 to vector<8x4xf32>
    %3 = arith.subf %2, %0 : vector<8x4xf32>
    %4 = vector.extract_strided_slice %0 {offsets = [0, 0], sizes = [8, 1], strides = [1, 1]} : vector<8x4xf32> to vector<8x1xf32>
    %5 = vector.extract_strided_slice %3 {offsets = [0, 0], sizes = [8, 1], strides = [1, 1]} : vector<8x4xf32> to vector<8x1xf32>
    %6 = vector.extract_strided_slice %1 {offsets = [0, 0], sizes = [1, 128], strides = [1, 1]} : vector<4x128xf32> to vector<1x128xf32>
    %7 = vector.broadcast %4 : vector<8x1xf32> to vector<8x128xf32>
    %8 = vector.broadcast %6 : vector<1x128xf32> to vector<8x128xf32>
    %9 = arith.mulf %7, %8 : vector<8x128xf32>
    %10 = vector.broadcast %5 : vector<8x1xf32> to vector<8x128xf32>
    %11 = arith.addf %9, %10 : vector<8x128xf32>
    %12 = vector.extract_strided_slice %0 {offsets = [0, 1], sizes = [8, 1], strides = [1, 1]} : vector<8x4xf32> to vector<8x1xf32>
    %13 = vector.extract_strided_slice %3 {offsets = [0, 1], sizes = [8, 1], strides = [1, 1]} : vector<8x4xf32> to vector<8x1xf32>
    %14 = vector.extract_strided_slice %1 {offsets = [1, 0], sizes = [1, 128], strides = [1, 1]} : vector<4x128xf32> to vector<1x128xf32>
    %15 = vector.broadcast %12 : vector<8x1xf32> to vector<8x128xf32>
    %16 = vector.broadcast %14 : vector<1x128xf32> to vector<8x128xf32>
    %17 = arith.mulf %15, %16 : vector<8x128xf32>
    %18 = vector.broadcast %13 : vector<8x1xf32> to vector<8x128xf32>
    %19 = arith.addf %17, %18 : vector<8x128xf32>
    %20 = arith.mulf %11, %19 : vector<8x128xf32>
    %21 = arith.mulf %5, %13 : vector<8x1xf32>
    %22 = vector.extract_strided_slice %0 {offsets = [0, 2], sizes = [8, 1], strides = [1, 1]} : vector<8x4xf32> to vector<8x1xf32>
    %23 = vector.extract_strided_slice %3 {offsets = [0, 2], sizes = [8, 1], strides = [1, 1]} : vector<8x4xf32> to vector<8x1xf32>
    %24 = vector.extract_strided_slice %1 {offsets = [2, 0], sizes = [1, 128], strides = [1, 1]} : vector<4x128xf32> to vector<1x128xf32>
    %25 = vector.broadcast %22 : vector<8x1xf32> to vector<8x128xf32>
    %26 = vector.broadcast %24 : vector<1x128xf32> to vector<8x128xf32>
    %27 = arith.mulf %25, %26 : vector<8x128xf32>
    %28 = vector.broadcast %23 : vector<8x1xf32> to vector<8x128xf32>
    %29 = arith.addf %27, %28 : vector<8x128xf32>
    %30 = arith.mulf %20, %29 : vector<8x128xf32>
    %31 = arith.mulf %21, %23 : vector<8x1xf32>
    %32 = vector.extract_strided_slice %0 {offsets = [0, 3], sizes = [8, 1], strides = [1, 1]} : vector<8x4xf32> to vector<8x1xf32>
    %33 = vector.extract_strided_slice %3 {offsets = [0, 3], sizes = [8, 1], strides = [1, 1]} : vector<8x4xf32> to vector<8x1xf32>
    %34 = vector.extract_strided_slice %1 {offsets = [3, 0], sizes = [1, 128], strides = [1, 1]} : vector<4x128xf32> to vector<1x128xf32>
    %35 = vector.broadcast %32 : vector<8x1xf32> to vector<8x128xf32>
    %36 = vector.broadcast %34 : vector<1x128xf32> to vector<8x128xf32>
    %37 = arith.mulf %35, %36 : vector<8x128xf32>
    %38 = vector.broadcast %33 : vector<8x1xf32> to vector<8x128xf32>
    %39 = arith.addf %37, %38 : vector<8x128xf32>
    %40 = arith.mulf %30, %39 : vector<8x128xf32>
    %41 = arith.mulf %31, %33 : vector<8x1xf32>
    %42 = vector.broadcast %41 : vector<8x1xf32> to vector<8x128xf32>
    %43 = arith.subf %40, %42 : vector<8x128xf32>
    %cst_3 = arith.constant dense<0.000000e+00> : vector<8xf32>
    %44 = vector.multi_reduction <add>, %43, %cst_3 [1] : vector<8x128xf32> to vector<8xf32>
    %45 = vector.shape_cast %44 : vector<8xf32> to vector<8x1xf32>
    %46 = tpu.reciprocal %45 {approx = true} : vector<8x1xf32> -> vector<8x1xf32>
    %47 = arith.mulf %45, %46 : vector<8x1xf32>
    %cst_4 = arith.constant 2.000000e+00 : f32
    %48 = vector.broadcast %cst_4 : f32 to vector<8x1xf32>
    %49 = arith.subf %48, %47 : vector<8x1xf32>
    %50 = arith.mulf %46, %49 : vector<8x1xf32>
    %51 = vector.broadcast %50 : vector<8x1xf32> to vector<8x128xf32>
    %52 = arith.mulf %43, %51 : vector<8x128xf32>
    %c0_5 = arith.constant 0 : index
    %c0_6 = arith.constant 0 : index
    %53 = vector.load %arg3[%c0_5, %c0_6] : memref<8x128xf32, #tpu.memory_space<vmem>>, vector<8x128xf32>
    tpu.vector_store %arg3[%c0_5, %c0_6], %52 {strides = array<i32>} : memref<8x128xf32, #tpu.memory_space<vmem>>, vector<8x128xf32>,
    return
  }
  func.func @transform_0(%arg0: i32) -> (i32, i32) {
    %c0_i32 = arith.constant 0 : i32
    %c0_i32_0 = arith.constant 0 : i32
    return %arg0, %c0_i32 : i32, i32
  }
  func.func @transform_1(%arg0: i32) -> (i32, i32) {
    %c0_i32 = arith.constant 0 : i32
    %c0_i32_0 = arith.constant 0 : i32
    %c0_i32_1 = arith.constant 0 : i32
    return %c0_i32, %c0_i32_0 : i32, i32
  }
  func.func @transform_2(%arg0: i32) -> (i32, i32) {
    %c0_i32 = arith.constant 0 : i32
    %c0_i32_0 = arith.constant 0 : i32
    return %arg0, %c0_i32 : i32, i32
  }
}

</mosaic_0001>

<llo_original>
// kernel: tpu_custom_call.1
$region0: #{tpu_custom_call.1}
  #allocation0 [shape = 'u32[]', space=smem, size = 0x4, offset = 0x4, fixed_abs, tag = 'smem constant byte address 0x4 - core index']
  #allocation1 [shape = 'u32[144,128]{1,0:T(1,128)}', space=vmem, size = 0x12000, scoped, tag = 'internal scratch']
  %s0 = inlined_call_operand.vmem [shape: f32[8,4], index: 0, kind: input, shape index: {}]
  %s1 = inlined_call_operand.vmem [shape: f32[4,128], index: 1, kind: input, shape index: {}]
  %s2 = inlined_call_operand.hbm [shape: f32[8,128], index: 2, kind: output, shape index: {}]
  %s3 = sld [smem:[#allocation0]]
  $region18: #{tpu_custom_call.1} parent=0
    _
  %s5 = ssub.s32 1, %s3
  %s6 = scalar_select 0, %s5, %s3
  $region1: #{tpu_custom_call.1} parent=0
    #allocation2 [shape = 'u8[4096]{0}', space=vmem, size = 0x1000, scoped, tag = 'output window, operand 0, single buffered']
    #allocation3 [shape = 's32[1]{0}', space=sflag, size = 0x4, scoped, tag = 'scoped memory for tpu_custom_call.1']
    %7 = vsyncpa [#allocation3], 0
    // Predicated region
    $region2: #{tpu_custom_call.1} parent=1 // pred_check
      _
    $region3: #{tpu_custom_call.1} parent=1 // pred_check_branch
      %9 = sbr.rel (0) target = $region5
    $region4: #{tpu_custom_call.1} parent=1 // pred_region
      _
    $region5: #{tpu_custom_call.1} parent=1 // pred_fallthru
      _
    // Predicated region
    $region6: #{tpu_custom_call.1} parent=1 // pred_check
      _
    $region7: #{tpu_custom_call.1} parent=1 // pred_check_branch
      %11 = sbr.rel (0) target = $region9
    $region8: #{tpu_custom_call.1} parent=1 // pred_region
      _
    $region9: #{tpu_custom_call.1} parent=1 // pred_fallthru
      _
    %v12 = vld [vmem:[%s0] sm:$0xff]
    %v13 = vld [vmem:[%s1] sm:$0xf]
    %v14 = vsub.f32 1.0, %v12
    %16 = vset.pattern.permute.xlu0 0
    %17 = vperm.xlu0 %16, %v12
    %v18 = vpop.permute.xlu0 %17
    %v20 = vlaneseq
    %v21 = vshrl.u32 %v20, 7
    %v22 = vsub.s32 0, %v21
    %v23 = vrot.slane %v13, %v22
    %v24 = vmul.f32 %v18, %v23
    %26 = vset.pattern.permute.xlu0 0
    %27 = vperm.xlu0 %26, %v14
    %v28 = vpop.permute.xlu0 %27
    %v30 = vadd.f32 %v24, %v28
    %31 = vset.pattern.permute.xlu0 1
    %32 = vperm.xlu0 %31, %v12
    %v33 = vpop.permute.xlu0 %32
    %v35 = vlaneseq
    %v36 = vshrl.u32 %v35, 7
    %v37 = vsub.s32 1, %v36
    %v38 = vrot.slane %v13, %v37
    %v39 = vmul.f32 %v33, %v38
    %40 = vset.pattern.permute.xlu0 1
    %41 = vperm.xlu0 %40, %v14
    %v42 = vpop.permute.xlu0 %41
    %v44 = vadd.f32 %v39, %v42
    %v45 = vmul.f32 %v30, %v44
    %46 = vrot.lane.b32.xlu0 %v14, 127
    %v47 = vpop.permute.xlu0 %46
    %v49 = vmul.f32 %v14, %v47
    %50 = vset.pattern.permute.xlu0 2
    %51 = vperm.xlu0 %50, %v12
    %v52 = vpop.permute.xlu0 %51
    %v54 = vlaneseq
    %v55 = vshrl.u32 %v54, 7
    %v56 = vsub.s32 2, %v55
    %v57 = vrot.slane %v13, %v56
    %v58 = vmul.f32 %v52, %v57
    %59 = vset.pattern.permute.xlu0 2
    %60 = vperm.xlu0 %59, %v14
    %v61 = vpop.permute.xlu0 %60
    %v63 = vadd.f32 %v58, %v61
    %v64 = vmul.f32 %v45, %v63
    %65 = vrot.lane.b32.xlu0 %v14, 126
    %v66 = vpop.permute.xlu0 %65
    %v68 = vmul.f32 %v49, %v66
    %69 = vset.pattern.permute.xlu0 3
    %70 = vperm.xlu0 %69, %v12
    %v71 = vpop.permute.xlu0 %70
    %v73 = vlaneseq
    %v74 = vshrl.u32 %v73, 7
    %v75 = vsub.s32 3, %v74
    %v76 = vrot.slane %v13, %v75
    %v77 = vmul.f32 %v71, %v76
    %78 = vset.pattern.permute.xlu0 3
    %79 = vperm.xlu0 %78, %v14
    %v80 = vpop.permute.xlu0 %79
    %v82 = vadd.f32 %v77, %v80
    %v83 = vmul.f32 %v64, %v82
    %84 = vrot.lane.b32.xlu0 %v14, 125
    %v85 = vpop.permute.xlu0 %84
    %v87 = vmul.f32 %v68, %v85
    %89 = vset.pattern.permute.xlu0 0
    %90 = vperm.xlu0 %89, %v87
    %v91 = vpop.permute.xlu0 %90
    %v93 = vsub.f32 %v83, %v91
    %94 = vadd.xlane.f32.xlu0 %v93
    %v95 = vpop.xlane.xlu0 %94
    %v96 = vrcp.pop %v95
    %v97 = vmul.f32 %v95, %v96
    %v98 = vsub.f32 2.0, %v97
    %v99 = vmul.f32 %v96, %v98
    %v100 = vmul.f32 %v93, %v99
    %101 = vst [vmem:[#allocation2] sm:$0xff] %v100
    // Predicated region
    $region10: #{tpu_custom_call.1} parent=1 // pred_check
      _
    $region11: #{tpu_custom_call.1} parent=1 // pred_check_branch
      %103 = sbr.rel (0) target = $region13
    $region12: #{tpu_custom_call.1} parent=1 // pred_region
      %s105 = ssub.s32 128, 128
      %106 = vsyncadd [#allocation3], %s105
      %s108 = sshll.u32 [#allocation2], 4
      %s109 = int_to_ptr.vmem [resolvable:$true] %s108
      %111 = dma.vmem_to_hbm [thread:$0]  %s109, 128, %s2, [#allocation3]
    $region13: #{tpu_custom_call.1} parent=1 // pred_fallthru
      _
    // Predicated region
    $region14: #{tpu_custom_call.1} parent=1 // pred_check
      _
    $region15: #{tpu_custom_call.1} parent=1 // pred_check_branch
      %113 = sbr.rel (0) target = $region17
    $region16: #{tpu_custom_call.1} parent=1 // pred_region
      %114 = dma.done [#allocation3], 128
    $region17: #{tpu_custom_call.1} parent=1 // pred_fallthru
      _
    %115 = vsyncpa [#allocation3], 1

</llo_original>
